<compile_context>
chip_gen: v7x
topology: tpu7x:2x2x1
jax: 0.10.0
libtpu: 0.0.40
codegen_flags: <defaults>
</compile_context>

<pallas_src>
import functools

import jax
import jax.numpy as jnp
from jax.experimental import pallas as pl
from jax.experimental.pallas import tpu as pltpu


def _tversky_kernel(x_ref, t_ref, o_ref, acc_ref, *,
                    hw_valid, hw_tile, blocks_per_chunk, needs_mask):
    k = pl.program_id(2)

    @pl.when(k == 0)
    def _():
        acc_ref[...] = jnp.zeros_like(acc_ref)

    x = x_ref[0].astype(jnp.float32)      # (C, T) logits, cast after native-dtype DMA
    t = t_ref[0].astype(jnp.int32)        # (1, T) labels, cast after narrow-dtype DMA

    valid = None
    if needs_mask:
        # Ragged-tail mask: lanes past HW hold unspecified VMEM data; force them
        # to a finite value before exp and drop their contribution afterwards.
        p = pl.program_id(1)
        block_start = (p * blocks_per_chunk + k) * hw_tile
        lane = jax.lax.broadcasted_iota(jnp.int32, t.shape, 1)
        valid = (lane + block_start) < hw_valid
        x = jnp.where(valid, x, 0.0)

    # Numerically stable softmax; only the true-class probability is needed.
    m = jnp.max(x, axis=0, keepdims=True)                         # (1, T)
    e_sum = jnp.sum(jnp.exp(x - m), axis=0, keepdims=True)        # (1, T)

    cls = jax.lax.broadcasted_iota(jnp.int32, x.shape, 0)         # (C, T)
    x_true = jnp.sum(jnp.where(cls == t, x, 0.0), axis=0, keepdims=True)
    p_true = jnp.exp(x_true - m) / e_sum                          # (1, T)
    if needs_mask:
        p_true = jnp.where(valid, p_true, 0.0)

    acc_ref[...] += jnp.sum(p_true, axis=1, keepdims=True)        # (1, 1)

    @pl.when(k == pl.num_programs(2) - 1)
    def _():
        # Lane-dense (8,128) per-(sample, chunk) partial intersection.
        o_ref[...] = jnp.broadcast_to(acc_ref[...], o_ref.shape).astype(o_ref.dtype)


def _vmem_budget():
    """(scoped vmem_limit_bytes, target logits-block bytes) per TPU generation."""
    phys = 64 * 1024 * 1024  # conservative default (v7x-sized VMEM)
    try:
        info = pltpu.get_tpu_info()
        phys = int(getattr(info, "vmem_capacity_bytes", phys))
    except Exception:  # trace-time query unavailable -> stay conservative
        pass
    if phys >= 100 * 1024 * 1024:          # v5e / v6e: 128 MiB physical VMEM
        return 64 * 1024 * 1024, 12 * 1024 * 1024
    return 48 * 1024 * 1024, 8 * 1024 * 1024   # v7x: 64 MiB physical VMEM


def _choose_hw_tile(hw, c, itemsize, vmem_limit_bytes, target_block_bytes):
    """Lane tile (multiple of 128) sized in bytes, bounded by the VMEM budget.

    Per-lane VMEM: 2x double-buffered native logits + 2x (<=4B) labels +
    ~3x f32 in-kernel intermediates (f32 cast, exp(x-m), select temps)."""
    hw128 = pl.cdiv(hw, 128) * 128
    per_lane = 2 * c * itemsize + 2 * 4 + 3 * c * 4
    lanes_by_vmem = int(vmem_limit_bytes * 0.85) // per_lane
    lanes_by_target = max(128, target_block_bytes // max(1, c * itemsize))
    lanes = max(128, (min(lanes_by_vmem, lanes_by_target) // 128) * 128)
    return min(lanes, hw128)


def tversky_loss_pallas(logits, target, alpha, beta, eps=1e-8):
    """logits: (N, C, H, W) float, target: (N, H, W) int in [0, C) -> scalar f32."""
    N, C, H, W = logits.shape
    HW = H * W

    x = logits.reshape(N, C, HW)          # native dtype — single HBM pass, no pad
    t = target.reshape(N, 1, HW)          # native (narrow) label dtype

    vmem_limit, block_bytes = _vmem_budget()
    hw_tile = _choose_hw_tile(HW, C, jnp.dtype(logits.dtype).itemsize,
                              vmem_limit, block_bytes)
    num_hw = pl.cdiv(HW, hw_tile)

    # Spatial parallel split so v7x's second TensorCore has work at tiny batch.
    # (Only when the block count splits evenly, keeping index maps affine.)
    P = 2 if (N < 2 and num_hw >= 2 and num_hw % 2 == 0) else 1
    K = num_hw // P
    needs_mask = (num_hw * hw_tile) != HW

    kernel = functools.partial(
        _tversky_kernel,
        hw_valid=int(HW), hw_tile=int(hw_tile),
        blocks_per_chunk=int(K), needs_mask=bool(needs_mask),
    )

    def _in_map(n, p, k):
        return (n, 0, p * K + k)

    def _out_map(n, p, k):
        return (n, p, 0, 0)

    lanes_streamed = N * P * K * hw_tile
    cost = pl.CostEstimate(
        flops=int((5 * C + 8) * lanes_streamed),
        transcendentals=int((C + 1) * lanes_streamed),
        bytes_accessed=int(lanes_streamed * (C * x.dtype.itemsize + t.dtype.itemsize)
                           + N * P * 8 * 128 * 4),
    )

    partial_inter = pl.pallas_call(
        kernel,
        out_shape=jax.ShapeDtypeStruct((N, P, 8, 128), jnp.float32),
        grid_spec=pltpu.PrefetchScalarGridSpec(
            num_scalar_prefetch=0,
            grid=(N, P, K),                         # reduction (HW) axis last
            in_specs=[
                pl.BlockSpec((1, C, hw_tile), _in_map),
                pl.BlockSpec((1, 1, hw_tile), _in_map),
            ],
            out_specs=pl.BlockSpec((1, 1, 8, 128), _out_map),
            scratch_shapes=[pltpu.VMEM((1, 1), jnp.float32)],
        ),
        compiler_params=pltpu.CompilerParams(
            dimension_semantics=("parallel", "parallel", "arbitrary"),
            vmem_limit_bytes=int(vmem_limit),
        ),
        cost_estimate=cost,
    )(x, t)

    # Finalize in JAX (free): fps == fns == HW - intersection, exactly, because
    # softmax sums to 1 per pixel and every label is in [0, C).
    inter = jnp.sum(partial_inter[:, :, 0, 0], axis=1)        # (N,)
    hw_f = jnp.float32(HW)   # NOTE: exact only for HW <= 2^24 pixels (f32)
    fp_fn = hw_f - inter
    tv = inter / (inter + (alpha + beta) * fp_fn + eps)
    return jnp.mean(1.0 - tv)


def _tversky_loss_ref(logits, target, alpha, beta, eps=1e-8):
    # pure-JAX reference mirroring the PyTorch semantics
    soft = jax.nn.softmax(logits.astype(jnp.float32), axis=1)
    onehot = jax.nn.one_hot(target, logits.shape[1], dtype=soft.dtype)
    onehot = jnp.moveaxis(onehot, -1, 1)  # (N, C, H, W)
    dims = (1, 2, 3)
    inter = jnp.sum(soft * onehot, axis=dims)
    fps = jnp.sum(soft * (1.0 - onehot), axis=dims)
    fns = jnp.sum((1.0 - soft) * onehot, axis=dims)
    tv = inter / (inter + alpha * fps + beta * fns + eps)
    return jnp.mean(1.0 - tv)


if __name__ == "__main__":
    key = jax.random.PRNGKey(0)
    k1, k2 = jax.random.split(key)

    N, C, H, W = 2, 4, 16, 16
    alpha, beta = 0.5, 0.5

    logits = jax.random.normal(k1, (N, C, H, W), dtype=jnp.float32)
    target = jax.random.randint(k2, (N, H, W), 0, C, dtype=jnp.int32)

    loss = tversky_loss_pallas(logits, target, alpha, beta)
    loss = jax.block_until_ready(loss)

    ref = _tversky_loss_ref(logits, target, alpha, beta)
    assert jnp.allclose(loss, ref, atol=1e-5, rtol=1e-5), (loss, ref)

    print("KERNEL_OK")
</pallas_src>

<mosaic_0001>
module attributes {stable_mosaic.version = 11 : i64} {
  func.func @_tversky_kernel(%arg0: i32, %arg1: i32, %arg2: i32, %arg3: memref<1x4x256xf32, #tpu.memory_space<vmem>>, %arg4: memref<1x1x256xi32, #tpu.memory_space<vmem>>, %arg5: memref<1x1x8x128xf32, #tpu.memory_space<vmem>>, %arg6: memref<1x1xf32, #tpu.memory_space<vmem>>) attributes {dimension_semantics = [#tpu.dimension_semantics<parallel>, #tpu.dimension_semantics<parallel>, #tpu.dimension_semantics<arbitrary>], iteration_bounds = array<i64: 2, 1, 1>, scalar_prefetch = 0 : i64, scratch_operands = 1 : i64, tpu.core_type = #tpu.core_type<tc>, window_params = [{transform_indices = @transform_0, window_bounds = array<i64: 1, 4, 256>}, {transform_indices = @transform_1, window_bounds = array<i64: 1, 1, 256>}, {transform_indices = @transform_2, window_bounds = array<i64: 1, 1, 8, 128>}]} {
    %c0_i32 = arith.constant 0 : i32
    %0 = arith.cmpi eq, %arg2, %c0_i32 : i32
    %1 = arith.extui %0 : i1 to i32
    %c0_i32_0 = arith.constant 0 : i32
    %2 = arith.cmpi ne, %1, %c0_i32_0 : i32
    scf.if %2 {
      %cst_16 = arith.constant 0.000000e+00 : f32
      %32 = vector.broadcast %cst_16 : f32 to vector<1x1xf32>
      %c0_17 = arith.constant 0 : index
      %c0_18 = arith.constant 0 : index
      %33 = vector.load %arg6[%c0_17, %c0_18] : memref<1x1xf32, #tpu.memory_space<vmem>>, vector<1x1xf32>
      tpu.vector_store %arg6[%c0_17, %c0_18], %32 {strides = array<i32>} : memref<1x1xf32, #tpu.memory_space<vmem>>, vector<1x1xf32>,
    } else {
    }
    %c0 = arith.constant 0 : index
    %c0_1 = arith.constant 0 : index
    %c0_2 = arith.constant 0 : index
    %3 = vector.load %arg3[%c0, %c0_1, %c0_2] : memref<1x4x256xf32, #tpu.memory_space<vmem>>, vector<1x4x256xf32>
    %4 = vector.shape_cast %3 : vector<1x4x256xf32> to vector<4x256xf32>
    %c0_3 = arith.constant 0 : index
    %c0_4 = arith.constant 0 : index
    %c0_5 = arith.constant 0 : index
    %5 = vector.load %arg4[%c0_3, %c0_4, %c0_5] : memref<1x1x256xi32, #tpu.memory_space<vmem>>, vector<1x1x256xi32>
    %6 = vector.shape_cast %5 : vector<1x1x256xi32> to vector<1x256xi32>
    %cst = arith.constant dense<0xFF800000> : vector<256xf32>
    %7 = vector.multi_reduction <maximumf>, %4, %cst [0] : vector<4x256xf32> to vector<256xf32>
    %8 = vector.shape_cast %7 : vector<256xf32> to vector<1x256xf32>
    %9 = vector.broadcast %8 : vector<1x256xf32> to vector<4x256xf32>
    %10 = arith.subf %4, %9 : vector<4x256xf32>
    %11 = math.exp %10 : vector<4x256xf32>
    %cst_6 = arith.constant dense<0.000000e+00> : vector<256xf32>
    %12 = vector.multi_reduction <add>, %11, %cst_6 [0] : vector<4x256xf32> to vector<256xf32>
    %13 = vector.shape_cast %12 : vector<256xf32> to vector<1x256xf32>
    %14 = tpu.iota {dimensions = array<i32: 0>} : vector<4x256xi32>
    %15 = vector.broadcast %6 : vector<1x256xi32> to vector<4x256xi32>
    %16 = arith.cmpi eq, %14, %15 : vector<4x256xi32>
    %cst_7 = arith.constant 0.000000e+00 : f32
    %17 = vector.broadcast %cst_7 : f32 to vector<4x256xf32>
    %18 = arith.select %16, %4, %17 : vector<4x256xi1>, vector<4x256xf32>
    %cst_8 = arith.constant dense<0.000000e+00> : vector<256xf32>
    %19 = vector.multi_reduction <add>, %18, %cst_8 [0] : vector<4x256xf32> to vector<256xf32>
    %20 = vector.shape_cast %19 : vector<256xf32> to vector<1x256xf32>
    %21 = arith.subf %20, %8 : vector<1x256xf32>
    %22 = math.exp %21 : vector<1x256xf32>
    %23 = arith.divf %22, %13 : vector<1x256xf32>
    %c0_9 = arith.constant 0 : index
    %c0_10 = arith.constant 0 : index
    %24 = vector.load %arg6[%c0_9, %c0_10] : memref<1x1xf32, #tpu.memory_space<vmem>>, vector<1x1xf32>
    %cst_11 = arith.constant dense<0.000000e+00> : vector<1xf32>
    %25 = vector.multi_reduction <add>, %23, %cst_11 [1] : vector<1x256xf32> to vector<1xf32>
    %26 = vector.shape_cast %25 : vector<1xf32> to vector<1x1xf32>
    %27 = arith.addf %24, %26 : vector<1x1xf32>
    %c0_12 = arith.constant 0 : index
    %c0_13 = arith.constant 0 : index
    %28 = vector.load %arg6[%c0_12, %c0_13] : memref<1x1xf32, #tpu.memory_space<vmem>>, vector<1x1xf32>
    tpu.vector_store %arg6[%c0_12, %c0_13], %27 {strides = array<i32>} : memref<1x1xf32, #tpu.memory_space<vmem>>, vector<1x1xf32>,
    %c0_i32_14 = arith.constant 0 : i32
    %29 = arith.cmpi eq, %arg2, %c0_i32_14 : i32
    %30 = arith.extui %29 : i1 to i32
    %c0_i32_15 = arith.constant 0 : i32
    %31 = arith.cmpi ne, %30, %c0_i32_15 : i32
    scf.if %31 {
      %c0_16 = arith.constant 0 : index
      %c0_17 = arith.constant 0 : index
      %32 = vector.load %arg6[%c0_16, %c0_17] : memref<1x1xf32, #tpu.memory_space<vmem>>, vector<1x1xf32>
      %33 = vector.shape_cast %32 : vector<1x1xf32> to vector<1x1x1x1xf32>
      %34 = vector.broadcast %33 : vector<1x1x1x1xf32> to vector<1x1x8x128xf32>
      %c0_18 = arith.constant 0 : index
      %c0_19 = arith.constant 0 : index
      %c0_20 = arith.constant 0 : index
      %c0_21 = arith.constant 0 : index
      %35 = vector.load %arg5[%c0_18, %c0_19, %c0_20, %c0_21] : memref<1x1x8x128xf32, #tpu.memory_space<vmem>>, vector<1x1x8x128xf32>
      tpu.vector_store %arg5[%c0_18, %c0_19, %c0_20, %c0_21], %34 {strides = array<i32>} : memref<1x1x8x128xf32, #tpu.memory_space<vmem>>, vector<1x1x8x128xf32>,
    } else {
    }
    return
  }
  func.func @transform_0(%arg0: i32, %arg1: i32, %arg2: i32) -> (i32, i32, i32) {
    %c1_i32 = arith.constant 1 : i32
    %0 = arith.muli %arg1, %c1_i32 : i32
    %1 = arith.addi %0, %arg2 : i32
    %c0_i32 = arith.constant 0 : i32
    %c0_i32_0 = arith.constant 0 : i32
    return %arg0, %c0_i32, %1 : i32, i32, i32
  }
  func.func @transform_1(%arg0: i32, %arg1: i32, %arg2: i32) -> (i32, i32, i32) {
    %c1_i32 = arith.constant 1 : i32
    %0 = arith.muli %arg1, %c1_i32 : i32
    %1 = arith.addi %0, %arg2 : i32
    %c0_i32 = arith.constant 0 : i32
    %c0_i32_0 = arith.constant 0 : i32
    return %arg0, %c0_i32, %1 : i32, i32, i32
  }
  func.func @transform_2(%arg0: i32, %arg1: i32, %arg2: i32) -> (i32, i32, i32, i32) {
    %c0_i32 = arith.constant 0 : i32
    %c0_i32_0 = arith.constant 0 : i32
    %c0_i32_1 = arith.constant 0 : i32
    return %arg0, %arg1, %c0_i32, %c0_i32_0 : i32, i32, i32, i32
  }
}

</mosaic_0001>

<llo_original>
// kernel: tpu_custom_call.1
$region0: #{tpu_custom_call.1}
  #allocation0 [shape = 'u32[]', space=smem, size = 0x4, offset = 0x4, fixed_abs, tag = 'smem constant byte address 0x4 - core index']
  #allocation1 [shape = 'u32[144,128]{1,0:T(1,128)}', space=vmem, size = 0x12000, scoped, tag = 'internal scratch']
  #allocation2 [shape = 'f32[1,1]{1,0:T(1,128)}', space=vmem, size = 0x200, scoped, tag = 'scratch operand']
  %s0 = inlined_call_operand.hbm [shape: f32[2,4,256], index: 0, kind: input, shape index: {}]
  %s1 = inlined_call_operand.hbm [shape: s32[2,1,256], index: 1, kind: input, shape index: {}]
  %s2 = inlined_call_operand.hbm [shape: f32[2,1,8,128], index: 2, kind: output, shape index: {}]
  %s3 = sld [smem:[#allocation0]]
  $region57: #{tpu_custom_call.1} parent=0
    _
  %s5 = ssub.s32 1, %s3
  %s6 = scalar_select 0, %s5, %s3
  $region1: #{tpu_custom_call.1} parent=0
    #allocation3 [shape = 'u8[8192]{0}', space=vmem, size = 0x2000, scoped, tag = 'input window, operand 0']
    #allocation4 [shape = 's32[2]{0}', space=sflag, size = 0x8, scoped, tag = 'scoped memory for tpu_custom_call.1']
    #allocation5 [shape = 's32[2]{0}', space=sflag, size = 0x8, scoped, tag = 'scoped memory for tpu_custom_call.1']
    #allocation6 [shape = 'u8[2048]{0}', space=vmem, size = 0x800, scoped, tag = 'input window, operand 1']
    #allocation7 [shape = 's32[2]{0}', space=sflag, size = 0x8, scoped, tag = 'scoped memory for tpu_custom_call.1']
    #allocation8 [shape = 'u8[8192]{0}', space=vmem, size = 0x2000, scoped, tag = 'output window, operand 0']
    %7 = vsyncpa [#allocation4], 0
    %s8 = scalar_lea.sflag [#allocation4], 1
    %9 = vsyncpa %s8, 0
    %10 = vsyncpa [#allocation7], 0
    %s11 = scalar_lea.sflag [#allocation7], 1
    %12 = vsyncpa %s11, 0
    %13 = vsyncpa [#allocation5], 0
    %s14 = scalar_lea.sflag [#allocation5], 1
    %15 = vsyncpa %s14, 0
    loop: start=0, step=1, limit=4
    $region2: #{tpu_custom_call.1} parent=1 // loop_pre_header
      _
    $region3: #{tpu_custom_call.1} parent=1 // loop_header
      %s17 = sphi 0, %s21
      %p18 = scmp.ge.s32.totalorder %s17, 4
      %s24 = sphi 0, %s43
      %s25 = sphi 0, %s39
      %s26 = sphi 0, %s35
      %s27 = sphi 0, %s24
      %s28 = sphi 0, %s25
      %s29 = sphi 0, %s26
      %s30 = sphi 0, %s27
      %s31 = sphi 0, %s28
      %s32 = sphi 0, %s29
      %s50 = sphi 0, %s52
      %s53 = sphi 0, %s50
      %s54 = sphi 0, %s53
      %s70 = sphi 0, %s54
      %s80 = sphi 0, %s82
      %s83 = sphi 0, %s80
      %s84 = sphi 0, %s83
      %s100 = sphi 0, %s84
      %s108 = sphi 0, %s110
      %s111 = sphi 0, %s108
      %s112 = sphi 0, %s111
      %s128 = sphi 0, %s112
    $region4: #{tpu_custom_call.1} parent=1 // loop_header_branch
      %20 = sbr.rel (%p18) target = $region8
    $region5: #{tpu_custom_call.1} parent=1 // loop_body
      %s22 = ssub.s32 %s17, 1
      %s23 = ssub.s32 %s17, 2
      %s33 = sadd.s32 1, %s26
      %p34 = scmp.ge.s32.totalorder %s33, 1
      %s35 = scalar_select %p34, 0, %s33
      %s36 = sadd.s32 1, %s25
      %s37 = scalar_select %p34, %s36, %s25
      %p38 = scmp.ge.s32.totalorder %s37, 1
      %s39 = scalar_select %p38, 0, %s37
      %s40 = sadd.s32 1, %s24
      %s41 = scalar_select %p38, %s40, %s24
      %p42 = scmp.ge.s32.totalorder %s41, 2
      %s43 = scalar_select %p42, 0, %s41
      %s44 = sadd.s32 %s25, %s26
      %s45 = sadd.s32 %s39, %s35
      %s46 = ssub.s32 %s24, %s43
      %s47 = ssub.s32 %s44, %s45
      %s48 = sor.u32 %s46, %s47
      %p49 = scmp.eq.s32.totalorder %s48, 0
      %s51 = sadd.s32 %s50, 1
      %s52 = scalar_select %p49, %s50, %s51
      %p55 = pneg %p49
      %p56 = scmp.eq.s32.totalorder %s17, 1
      %p57 = por %p55, %p56
      %p58 = scmp.ne.s32.totalorder %s50, %s53
      %p59 = scmp.eq.s32.totalorder %s17, 0
      %p60 = por %p58, %p59
      %p61 = scmp.ne.s32.totalorder %s50, %s53
      %p62 = scmp.eq.s32.totalorder %s22, 1
      %p63 = por %p61, %p62
      %p64 = scmp.ne.s32.totalorder %s53, %s54
      %p65 = scmp.eq.s32.totalorder %s22, 0
      %p66 = por %p64, %p65
      %p67 = scmp.ne.s32.totalorder %s53, %s54
      %p68 = scmp.eq.s32.totalorder %s23, 1
      %p69 = por %p67, %p68
      %p71 = scmp.ne.s32.totalorder %s54, %s70
      %p72 = scmp.eq.s32.totalorder %s23, 0
      %p73 = por %p71, %p72
      %s74 = sadd.s32 %s25, %s26
      %s75 = sadd.s32 %s39, %s35
      %s76 = ssub.s32 %s24, %s43
      %s77 = ssub.s32 %s74, %s75
      %s78 = sor.u32 %s76, %s77
      %p79 = scmp.eq.s32.totalorder %s78, 0
      %s81 = sadd.s32 %s80, 1
      %s82 = scalar_select %p79, %s80, %s81
      %p85 = pneg %p79
      %p86 = scmp.eq.s32.totalorder %s17, 1
      %p87 = por %p85, %p86
      %p88 = scmp.ne.s32.totalorder %s80, %s83
      %p89 = scmp.eq.s32.totalorder %s17, 0
      %p90 = por %p88, %p89
      %p91 = scmp.ne.s32.totalorder %s80, %s83
      %p92 = scmp.eq.s32.totalorder %s22, 1
      %p93 = por %p91, %p92
      %p94 = scmp.ne.s32.totalorder %s83, %s84
      %p95 = scmp.eq.s32.totalorder %s22, 0
      %p96 = por %p94, %p95
      %p97 = scmp.ne.s32.totalorder %s83, %s84
      %p98 = scmp.eq.s32.totalorder %s23, 1
      %p99 = por %p97, %p98
      %p101 = scmp.ne.s32.totalorder %s84, %s100
      %p102 = scmp.eq.s32.totalorder %s23, 0
      %p103 = por %p101, %p102
      %s104 = ssub.s32 %s24, %s43
      %s105 = ssub.s32 %s25, %s39
      %s106 = sor.u32 %s104, %s105
      %p107 = scmp.eq.s32.totalorder %s106, 0
      %s109 = sadd.s32 %s108, 1
      %s110 = scalar_select %p107, %s108, %s109
      %p113 = pneg %p107
      %p114 = scmp.eq.s32.totalorder %s17, 1
      %p115 = por %p113, %p114
      %p116 = scmp.ne.s32.totalorder %s108, %s111
      %p117 = scmp.eq.s32.totalorder %s17, 0
      %p118 = por %p116, %p117
      %p119 = scmp.ne.s32.totalorder %s108, %s111
      %p120 = scmp.eq.s32.totalorder %s22, 1
      %p121 = por %p119, %p120
      %p122 = scmp.ne.s32.totalorder %s111, %s112
      %p123 = scmp.eq.s32.totalorder %s22, 0
      %p124 = por %p122, %p123
      %p125 = scmp.ne.s32.totalorder %s111, %s112
      %p126 = scmp.eq.s32.totalorder %s23, 1
      %p127 = por %p125, %p126
      %p129 = scmp.ne.s32.totalorder %s112, %s128
      %p130 = scmp.eq.s32.totalorder %s23, 0
      %p131 = por %p129, %p130
      %p132 = scmp.le.s32.totalorder 1, %s17
      %p133 = scmp.lt.s32.totalorder %s17, 3
      %p134 = pnand %p132, %p133
      %p135 = pneg %p134
      // Predicated region
      $region9: #{tpu_custom_call.1} parent=5 // pred_check
        _
      $region10: #{tpu_custom_call.1} parent=5 // pred_check_branch
        %137 = sbr.rel (%p134) target = $region12
      $region11: #{tpu_custom_call.1} parent=5 // pred_region
        %s138 = ssub.s32 %s17, 1
      $region12: #{tpu_custom_call.1} parent=5 // pred_fallthru
        _
      %p139 = scmp.lt.s32.totalorder %s17, 2
      // Predicated region
      $region13: #{tpu_custom_call.1} parent=5 // pred_check
        %p140 = pneg %p139
      $region14: #{tpu_custom_call.1} parent=5 // pred_check_branch
        %142 = sbr.rel (%p140) target = $region16
      $region15: #{tpu_custom_call.1} parent=5 // pred_region
        // Predicated region
        $region17: #{tpu_custom_call.1} parent=15 // pred_check
          %p143 = pneg %p60
        $region18: #{tpu_custom_call.1} parent=15 // pred_check_branch
          %145 = sbr.rel (%p143) target = $region20
        $region19: #{tpu_custom_call.1} parent=15 // pred_region
          %s146 = sand.u32 %s50, 1
          %s147 = scalar_lea.sflag [#allocation4], %s146
          %s148 = sand.u32 %s50, 1
          %s149 = smul.addr %s148, 8
          %s150 = scalar_lea.vmem [#allocation3], %s149
          %s151 = sadd.s32 %s25, %s26
          %s152 = smul.u32 2, %s151
          %s154 = ssub.s32 128, 128
          %155 = vsyncadd %s147, %s154
          %s156 = smul.addr %s24, 2
          %s157 = sadd.s32 %s152, %s156
          %s158 = smul.addr %s157, 64
          %s159 = scalar_lea.hbm %s0, %s158
          %s161 = sshll.u32 %s150, 4
          %s162 = int_to_ptr.vmem [resolvable:$true] %s161
          %164 = dma.hbm_to_vmem [thread:$0]  %s159, 128, %s162, %s147
        $region20: #{tpu_custom_call.1} parent=15 // pred_fallthru
          _
        // Predicated region
        $region21: #{tpu_custom_call.1} parent=15 // pred_check
          %p165 = pneg %p90
        $region22: #{tpu_custom_call.1} parent=15 // pred_check_branch
          %167 = sbr.rel (%p165) target = $region24
        $region23: #{tpu_custom_call.1} parent=15 // pred_region
          %s168 = sand.u32 %s80, 1
          %s169 = scalar_lea.sflag [#allocation7], %s168
          %s170 = sand.u32 %s80, 1
          %s171 = smul.addr %s170, 2
          %s172 = scalar_lea.vmem [#allocation6], %s171
          %s173 = sadd.s32 %s25, %s26
          %s174 = smul.u32 2, %s173
          %s176 = ssub.s32 32, 32
          %177 = vsyncadd %s169, %s176
          %s178 = smul.addr %s24, 2
          %s179 = sadd.s32 %s174, %s178
          %s180 = smul.addr %s179, 16
          %s181 = scalar_lea.hbm %s1, %s180
          %s183 = sshll.u32 %s172, 4
          %s184 = int_to_ptr.vmem [resolvable:$true] %s183
          %186 = dma.hbm_to_vmem [thread:$0]  %s181, 32, %s184, %s169
        $region24: #{tpu_custom_call.1} parent=15 // pred_fallthru
          _
      $region16: #{tpu_custom_call.1} parent=5 // pred_fallthru
        _
      %p187 = scmp.le.s32.totalorder 1, %s17
      %p188 = scmp.lt.s32.totalorder %s17, 3
      %p189 = pnand %p187, %p188
      %p190 = pneg %p189
      // Predicated region
      $region25: #{tpu_custom_call.1} parent=5 // pred_check
        _
      $region26: #{tpu_custom_call.1} parent=5 // pred_check_branch
        %192 = sbr.rel (%p189) target = $region28
      $region27: #{tpu_custom_call.1} parent=5 // pred_region
        %s193 = ssub.s32 %s17, 1
        %s194 = sand.u32 %s53, 1
        %s195 = scalar_lea.sflag [#allocation4], %s194
        %s196 = sand.u32 %s53, 1
        %s197 = smul.addr %s196, 8
        %s198 = scalar_lea.vmem [#allocation3], %s197
        // Predicated region
        $region29: #{tpu_custom_call.1} parent=27 // pred_check
          %p199 = pneg %p66
        $region30: #{tpu_custom_call.1} parent=27 // pred_check_branch
          %201 = sbr.rel (%p199) target = $region32
        $region31: #{tpu_custom_call.1} parent=27 // pred_region
          %202 = dma.done %s195, 128
        $region32: #{tpu_custom_call.1} parent=27 // pred_fallthru
          _
        %s203 = sand.u32 %s83, 1
        %s204 = scalar_lea.sflag [#allocation7], %s203
        %s205 = sand.u32 %s83, 1
        %s206 = smul.addr %s205, 2
        %s207 = scalar_lea.vmem [#allocation6], %s206
        // Predicated region
        $region33: #{tpu_custom_call.1} parent=27 // pred_check
          %p208 = pneg %p96
        $region34: #{tpu_custom_call.1} parent=27 // pred_check_branch
          %210 = sbr.rel (%p208) target = $region36
        $region35: #{tpu_custom_call.1} parent=27 // pred_region
          %211 = dma.done %s204, 32
        $region36: #{tpu_custom_call.1} parent=27 // pred_fallthru
          _
        %s212 = sand.u32 %s53, 1
        %s213 = scalar_lea.sflag [#allocation4], %s212
        %s214 = sand.u32 %s53, 1
        %s215 = smul.addr %s214, 8
        %s216 = scalar_lea.vmem [#allocation3], %s215
        %p217 = pneg %p66
        %p218 = pneg %p63
        %s219 = sand.u32 %s83, 1
        %s220 = scalar_lea.sflag [#allocation7], %s219
        %s221 = sand.u32 %s83, 1
        %s222 = smul.addr %s221, 2
        %s223 = scalar_lea.vmem [#allocation6], %s222
        %p224 = pneg %p96
        %p225 = pneg %p93
        %p226 = pneg %p124
        %p227 = pneg %p121
        %s228 = sand.u32 %s111, 1
        %s229 = scalar_lea.sflag [#allocation5], %s228
        %s230 = sand.u32 %s111, 1
        %s231 = smul.addr %s230, 8
        %s232 = scalar_lea.vmem [#allocation8], %s231
        %s233 = sadd.s32 %s28, %s29
        %s234 = smul.u32 2, %s233
        %s235 = sadd.s32 %s28, %s29
        %s236 = smul.u32 2, %s235
        %p237 = scmp.eq.s32.totalorder %s29, 0
        // Predicated region
        $region37: #{tpu_custom_call.1} parent=27 // pred_check
          %p238 = pneg %p237
        $region38: #{tpu_custom_call.1} parent=27 // pred_check_branch
          %240 = sbr.rel (%p238) target = $region40
        $region39: #{tpu_custom_call.1} parent=27 // pred_region
          %vm241 = vcmask 0
          %242 = vst.msk [vmem:[#allocation2] sm:$0x1] %vm241, 0.0
        $region40: #{tpu_custom_call.1} parent=27 // pred_fallthru
          _
        %v243 = vld [vmem:[%s198] sm:$0xff]
        %v244 = vld [vmem:[%s207] sm:$0x3]
        %v246 = vcombine.high %v243, %v243
        %vm248 = vcmask 1043456
        %v249 = vsel %vm248, %v243, -inf
        %v250 = vrot.slane %v249, 4
        %v251 = vmax.f32 %v249, %v250
        %v252 = vrot.slane %v251, 2
        %v253 = vmax.f32 %v251, %v252
        %v254 = vrot.slane %v253, 1
        %v255 = vmax.f32 %v253, %v254
        %v256 = vsel %vm248, %v246, -inf
        %v257 = vrot.slane %v256, 4
        %v258 = vmax.f32 %v256, %v257
        %v259 = vrot.slane %v258, 2
        %v260 = vmax.f32 %v258, %v259
        %v261 = vrot.slane %v260, 1
        %v262 = vmax.f32 %v260, %v261
        %v265 = vcombine.low %v255, %v262
        %v267 = vsub.f32 %v243, %v265
        %v268 = vmul.f32 %v267, 1.442695
        %v269 = vpow.pop %v268
        %v271 = vcombine.high %v269, %v269
        %v273 = vsel %vm248, %v269, 0.0
        %v274 = vrot.slane %v273, 4
        %v275 = vadd.f32 %v273, %v274
        %v276 = vrot.slane %v275, 2
        %v277 = vadd.f32 %v275, %v276
        %v278 = vrot.slane %v277, 1
        %v279 = vadd.f32 %v277, %v278
        %v280 = vsel %vm248, %v271, 0.0
        %v281 = vrot.slane %v280, 4
        %v282 = vadd.f32 %v280, %v281
        %v283 = vrot.slane %v282, 2
        %v284 = vadd.f32 %v282, %v283
        %v285 = vrot.slane %v284, 1
        %v286 = vadd.f32 %v284, %v285
        %v287 = vlaneseq
        %v288 = vshrl.u32 %v287, 7
        %v289 = vlaneseq
        %v290 = vshrl.u32 %v289, 7
        %v291 = vsub.s32 0, %v290
        %v292 = vrot.slane %v244, %v291
        %v293 = vlaneseq
        %v294 = vshrl.u32 %v293, 7
        %v295 = vsub.s32 1, %v294
        %v296 = vrot.slane %v244, %v295
        %vm297 = vcmp.eq.s32.totalorder %v288, %v292
        %vm298 = vcmp.eq.s32.totalorder %v288, %v296
        %v299 = vsel %vm297, %v243, 0.0
        %v300 = vsel %vm298, %v246, 0.0
        %v301 = vsel %vm248, %v299, 0.0
        %v302 = vrot.slane %v301, 4
        %v303 = vadd.f32 %v301, %v302
        %v304 = vrot.slane %v303, 2
        %v305 = vadd.f32 %v303, %v304
        %v306 = vrot.slane %v305, 1
        %v307 = vadd.f32 %v305, %v306
        %v308 = vsel %vm248, %v300, 0.0
        %v309 = vrot.slane %v308, 4
        %v310 = vadd.f32 %v308, %v309
        %v311 = vrot.slane %v310, 2
        %v312 = vadd.f32 %v310, %v311
        %v313 = vrot.slane %v312, 1
        %v314 = vadd.f32 %v312, %v313
        %v315 = vsub.f32 %v307, %v255
        %v316 = vsub.f32 %v314, %v262
        %v317 = vmul.f32 %v315, 1.442695
        %v318 = vpow.pop %v317
        %v319 = vmul.f32 %v316, 1.442695
        %v320 = vpow.pop %v319
        %v321 = vrcp.pop %v279
        %v322 = vmul.f32 %v318, %v321
        %v323 = vrcp.pop %v286
        %v324 = vmul.f32 %v320, %v323
        %v325 = vld [vmem:[#allocation2] sm:$0x1]
        %v326 = vadd.f32 %v322, %v324
        %327 = vadd.xlane.f32.xlu0 %v326
        %v328 = vpop.xlane.xlu0 %327
        %v329 = vadd.f32 %v325, %v328
        %vm330 = vcmask 0
        %331 = vst.msk [vmem:[#allocation2] sm:$0x1] %vm330, %v329
        // Predicated region
        $region41: #{tpu_custom_call.1} parent=27 // pred_check
          %p332 = pneg %p237
        $region42: #{tpu_custom_call.1} parent=27 // pred_check_branch
          %334 = sbr.rel (%p332) target = $region44
        $region43: #{tpu_custom_call.1} parent=27 // pred_region
          %v335 = vld [vmem:[#allocation2] sm:$0x1]
          %v337 = vlaneseq
          %v338 = vshrl.u32 %v337, 7
          %v339 = vsub.s32 0, %v338
          %v340 = vrot.slane %v335, %v339
          %341 = vset.pattern.permute.xlu0 0
          %342 = vperm.xlu0 %341, %v340
          %v343 = vpop.permute.xlu0 %342
          %345 = vst [vmem:[%s232] sm:$0xff] %v343
        $region44: #{tpu_custom_call.1} parent=27 // pred_fallthru
          _
        %s346 = sand.u32 %s111, 1
        %s347 = scalar_lea.sflag [#allocation5], %s346
        %s348 = sand.u32 %s111, 1
        %s349 = smul.addr %s348, 8
        %s350 = scalar_lea.vmem [#allocation8], %s349
        // Predicated region
        $region45: #{tpu_custom_call.1} parent=27 // pred_check
          %p351 = pneg %p121
        $region46: #{tpu_custom_call.1} parent=27 // pred_check_branch
          %353 = sbr.rel (%p351) target = $region48
        $region47: #{tpu_custom_call.1} parent=27 // pred_region
          %s355 = ssub.s32 128, 128
          %356 = vsyncadd %s347, %s355
          %s357 = sadd.s32 %s28, %s27
          %s358 = smul.addr %s357, 128
          %s359 = scalar_lea.hbm %s2, %s358
          %s361 = sshll.u32 %s350, 4
          %s362 = int_to_ptr.vmem [resolvable:$true] %s361
          %364 = dma.vmem_to_hbm [thread:$0]  %s362, 128, %s359, %s347
        $region48: #{tpu_custom_call.1} parent=27 // pred_fallthru
          _
      $region28: #{tpu_custom_call.1} parent=5 // pred_fallthru
        _
      %p365 = scmp.le.s32.totalorder 2, %s17
      // Predicated region
      $region49: #{tpu_custom_call.1} parent=5 // pred_check
        %p366 = pneg %p365
      $region50: #{tpu_custom_call.1} parent=5 // pred_check_branch
        %368 = sbr.rel (%p366) target = $region52
      $region51: #{tpu_custom_call.1} parent=5 // pred_region
        %s369 = ssub.s32 %s17, 2
        // Predicated region
        $region53: #{tpu_custom_call.1} parent=51 // pred_check
          %p370 = pneg %p127
        $region54: #{tpu_custom_call.1} parent=51 // pred_check_branch
          %372 = sbr.rel (%p370) target = $region56
        $region55: #{tpu_custom_call.1} parent=51 // pred_region
          %s373 = sand.u32 %s112, 1
          %s374 = scalar_lea.sflag [#allocation5], %s373
          %s375 = sand.u32 %s112, 1
          %s376 = smul.addr %s375, 8
          %s377 = scalar_lea.vmem [#allocation8], %s376
          %378 = dma.done %s374, 128
        $region56: #{tpu_custom_call.1} parent=51 // pred_fallthru
          _
      $region52: #{tpu_custom_call.1} parent=5 // pred_fallthru
        _
    $region6: #{tpu_custom_call.1} parent=1 // loop_footer
      %s21 = sadd.s32 1, %s17
    $region7: #{tpu_custom_call.1} parent=1 // loop_footer_branch
      %16 = sbr.rel target = $region3
    $region8: #{tpu_custom_call.1} parent=1 // loop_exit
      _
    %379 = vsyncpa [#allocation4], 1
    %s380 = scalar_lea.sflag [#allocation4], 1
    %381 = vsyncpa %s380, 1
    %382 = vsyncpa [#allocation7], 1
    %s383 = scalar_lea.sflag [#allocation7], 1
    %384 = vsyncpa %s383, 1
    %385 = vsyncpa [#allocation5], 1
    %s386 = scalar_lea.sflag [#allocation5], 1
    %387 = vsyncpa %s386, 1

</llo_original>
